<compile_context>
chip_gen: v7x
topology: tpu7x:2x2x1
jax: 0.10.0
libtpu: 0.0.40
codegen_flags: <defaults>
</compile_context>

<pallas_src>
import jax
import jax.numpy as jnp
from jax.experimental import pallas as pl
from jax.experimental.pallas import tpu as pltpu

IN_DIM = 384
HID_DIM = 100      # logical hidden width (matches nn.Linear(384,100)/(100,100))
HID_PAD = 128      # lane-dense padded hidden width used inside the kernel
NEG_SLOPE = 0.01   # nn.LeakyReLU default

TM_CAP = 1024            # max rows per batch tile (f32 working set ~8.8 MB)
MIN_ROWS_PER_CORE = 128  # below this, splitting across TCs is overhead-bound


def _leaky_relu(x):
    return jnp.where(x >= 0, x, NEG_SLOPE * x)


def _round_up(n, m):
    return ((n + m - 1) // m) * m


def _cdiv(a, b):
    return -(-a // b)


def _num_tensorcores():
    """Conservative TensorCore count per device (fallback: 1 == single tile)."""
    try:
        kind = jax.devices()[0].device_kind.lower()
    except Exception:
        return 1
    # v7x has 2 TCs per chip; v4/v5p megacore also benefits from >=2 parallel
    # grid tiles. v5e/v6e are single-TC -> one maximal tile.
    if any(tag in kind for tag in ("7", "v4", "v5p")):
        return 2
    return 1


_NUM_TC = _num_tensorcores()


def _choose_tiling(rows):
    """(tm, rows_pad) with at most ~one tile of pad slack."""
    n_tiles = _cdiv(rows, TM_CAP)
    if _NUM_TC >= 2 and rows >= _NUM_TC * MIN_ROWS_PER_CORE:
        # dual-TC parts: give each core a tile, but only for big-enough batches
        n_tiles = max(n_tiles, _NUM_TC)
    tm = _round_up(_cdiv(rows, n_tiles), 8)
    rows_pad = _round_up(rows, tm)
    return tm, rows_pad


def prepare_params(w1, b1, w2, b2):
    """Zero-pad the hidden dim 100 -> 128 (padded lanes stay exactly zero)."""
    w1p = jnp.zeros((IN_DIM, HID_PAD), jnp.float32).at[:, :HID_DIM].set(w1)
    b1p = jnp.zeros((1, HID_PAD), jnp.float32).at[:, :HID_DIM].set(b1)
    w2p = jnp.zeros((HID_PAD, HID_PAD), jnp.float32).at[:HID_DIM, :HID_DIM].set(w2)
    b2p = jnp.zeros((1, HID_PAD), jnp.float32).at[:, :HID_DIM].set(b2)
    return w1p, b1p, w2p, b2p


def twin_mlp_kernel(x1_ref, x2_ref, w1_ref, b1_ref, w2_ref, b2_ref,
                    o1_ref, o2_ref):
    """One batch-tile of BOTH shared-weight branches: 384 -> 128 -> 128."""
    w1 = w1_ref[...]
    b1 = b1_ref[...]
    w2 = w2_ref[...]
    b2 = b2_ref[...]

    def branch(x):
        h = _leaky_relu(
            jnp.dot(x, w1, preferred_element_type=jnp.float32) + b1)
        # TODO(synk): nn.Dropout(p=0.2) is identity in eval mode; training-mode
        # stochastic masking (torch RNG parity) is not reproduced here.
        return _leaky_relu(
            jnp.dot(h, w2, preferred_element_type=jnp.float32) + b2)

    o1_ref[...] = branch(x1_ref[...]).astype(o1_ref.dtype)
    o2_ref[...] = branch(x2_ref[...]).astype(o2_ref.dtype)


@jax.jit
def twin_forward_padded(input1, input2, w1p, b1p, w2p, b2p):
    """Both branches; returns lane-dense padded (rows_pad, 128) slabs.

    Rows >= batch and columns >= 100 are zero-padding; consumers that can read
    the padded slab directly avoid an extra HBM slice pass.
    """
    rows = input1.shape[0]
    tm, rows_pad = _choose_tiling(rows)
    if rows_pad != rows:
        pad = ((0, rows_pad - rows), (0, 0))
        input1 = jnp.pad(input1, pad)
        input2 = jnp.pad(input2, pad)

    grid = (rows_pad // tm,)
    weight_spec = [
        pl.BlockSpec((IN_DIM, HID_PAD), lambda i: (0, 0)),    # W1 (resident)
        pl.BlockSpec((1, HID_PAD), lambda i: (0, 0)),         # b1
        pl.BlockSpec((HID_PAD, HID_PAD), lambda i: (0, 0)),   # W2
        pl.BlockSpec((1, HID_PAD), lambda i: (0, 0)),         # b2
    ]

    out1, out2 = pl.pallas_call(
        twin_mlp_kernel,
        out_shape=(
            jax.ShapeDtypeStruct((rows_pad, HID_PAD), jnp.float32),
            jax.ShapeDtypeStruct((rows_pad, HID_PAD), jnp.float32),
        ),
        grid_spec=pltpu.PrefetchScalarGridSpec(
            num_scalar_prefetch=0,
            grid=grid,
            in_specs=[
                pl.BlockSpec((tm, IN_DIM), lambda i: (i, 0)),  # branch-1 rows
                pl.BlockSpec((tm, IN_DIM), lambda i: (i, 0)),  # branch-2 rows
            ] + weight_spec,
            out_specs=[
                pl.BlockSpec((tm, HID_PAD), lambda i: (i, 0)),
                pl.BlockSpec((tm, HID_PAD), lambda i: (i, 0)),
            ],
        ),
        compiler_params=pltpu.CompilerParams(
            dimension_semantics=("parallel",)),
    )(input1, input2, w1p, b1p, w2p, b2p)

    return out1, out2


def twin_forward(input1, input2, w1p, b1p, w2p, b2p):
    """Exact TwinNetwork.forward semantics: returns (x1, x2) of shape (B, 100)."""
    rows = input1.shape[0]
    o1, o2 = twin_forward_padded(input1, input2, w1p, b1p, w2p, b2p)
    return o1[:rows, :HID_DIM], o2[:rows, :HID_DIM]


def init_params(key):
    """Deterministic synthetic parameters (torch-like uniform fan-in init)."""
    k1, k2, k3, k4 = jax.random.split(key, 4)
    bound1 = 1.0 / (IN_DIM ** 0.5)
    bound2 = 1.0 / (HID_DIM ** 0.5)
    w1 = jax.random.uniform(k1, (IN_DIM, HID_DIM), jnp.float32, -bound1, bound1)
    b1 = jax.random.uniform(k2, (1, HID_DIM), jnp.float32, -bound1, bound1)
    w2 = jax.random.uniform(k3, (HID_DIM, HID_DIM), jnp.float32, -bound2, bound2)
    b2 = jax.random.uniform(k4, (1, HID_DIM), jnp.float32, -bound2, bound2)
    return w1, b1, w2, b2


def reference_forward(input1, input2, w1, b1, w2, b2):
    def branch(x):
        h = _leaky_relu(x @ w1 + b1)
        return _leaky_relu(h @ w2 + b2)
    return branch(input1), branch(input2)


if __name__ == "__main__":
    key = jax.random.PRNGKey(0)
    kp, ka, kb = jax.random.split(key, 3)

    w1, b1, w2, b2 = init_params(kp)
    w1p, b1p, w2p, b2p = prepare_params(w1, b1, w2, b2)

    # small primary test (B=8): exact module semantics via twin_forward
    B = 8
    input1 = jax.random.normal(ka, (B, IN_DIM), jnp.float32)
    input2 = jax.random.normal(kb, (B, IN_DIM), jnp.float32)

    x1, x2 = twin_forward(input1, input2, w1p, b1p, w2p, b2p)
    jax.block_until_ready((x1, x2))

    r1, r2 = reference_forward(input1, input2, w1, b1, w2, b2)
    assert x1.shape == (B, HID_DIM) and x2.shape == (B, HID_DIM)
    assert jnp.allclose(x1, r1, atol=1e-5, rtol=1e-5)
    assert jnp.allclose(x2, r2, atol=1e-5, rtol=1e-5)

    # awkward batch (B=300): exercises the fixed tiling (304 padded rows, not
    # 512) and the padded-slab consumption path recommended by the review.
    B2 = 300
    ka2, kb2 = jax.random.split(ka)
    i1 = jax.random.normal(ka2, (B2, IN_DIM), jnp.float32)
    i2 = jax.random.normal(kb2, (B2, IN_DIM), jnp.float32)
    p1, p2 = twin_forward_padded(i1, i2, w1p, b1p, w2p, b2p)
    jax.block_until_ready((p1, p2))
    assert p1.shape[0] < B2 + TM_CAP and p1.shape[1] == HID_PAD
    s1, s2 = reference_forward(i1, i2, w1, b1, w2, b2)
    assert jnp.allclose(p1[:B2, :HID_DIM], s1, atol=1e-5, rtol=1e-5)
    assert jnp.allclose(p2[:B2, :HID_DIM], s2, atol=1e-5, rtol=1e-5)

    print("KERNEL_OK")
</pallas_src>

<mosaic_0001>
module attributes {stable_mosaic.version = 11 : i64} {
  func.func @twin_mlp_kernel(%arg0: i32, %arg1: memref<8x384xf32, #tpu.memory_space<vmem>>, %arg2: memref<8x384xf32, #tpu.memory_space<vmem>>, %arg3: memref<384x128xf32, #tpu.memory_space<vmem>>, %arg4: memref<1x128xf32, #tpu.memory_space<vmem>>, %arg5: memref<128x128xf32, #tpu.memory_space<vmem>>, %arg6: memref<1x128xf32, #tpu.memory_space<vmem>>, %arg7: memref<8x128xf32, #tpu.memory_space<vmem>>, %arg8: memref<8x128xf32, #tpu.memory_space<vmem>>) attributes {dimension_semantics = [#tpu.dimension_semantics<parallel>], iteration_bounds = array<i64: 1>, scalar_prefetch = 0 : i64, scratch_operands = 0 : i64, tpu.core_type = #tpu.core_type<tc>, window_params = [{transform_indices = @transform_0, window_bounds = array<i64: 8, 384>}, {transform_indices = @transform_1, window_bounds = array<i64: 8, 384>}, {pipeline_mode = #tpu.pipeline_mode<synchronous>, transform_indices = @transform_2, window_bounds = array<i64: 384, 128>}, {pipeline_mode = #tpu.pipeline_mode<synchronous>, transform_indices = @transform_3, window_bounds = array<i64: 1, 128>}, {pipeline_mode = #tpu.pipeline_mode<synchronous>, transform_indices = @transform_4, window_bounds = array<i64: 128, 128>}, {pipeline_mode = #tpu.pipeline_mode<synchronous>, transform_indices = @transform_5, window_bounds = array<i64: 1, 128>}, {transform_indices = @transform_6, window_bounds = array<i64: 8, 128>}, {transform_indices = @transform_7, window_bounds = array<i64: 8, 128>}]} {
    %c0 = arith.constant 0 : index
    %c0_0 = arith.constant 0 : index
    %0 = vector.load %arg3[%c0, %c0_0] : memref<384x128xf32, #tpu.memory_space<vmem>>, vector<384x128xf32>
    %c0_1 = arith.constant 0 : index
    %c0_2 = arith.constant 0 : index
    %1 = vector.load %arg4[%c0_1, %c0_2] : memref<1x128xf32, #tpu.memory_space<vmem>>, vector<1x128xf32>
    %c0_3 = arith.constant 0 : index
    %c0_4 = arith.constant 0 : index
    %2 = vector.load %arg5[%c0_3, %c0_4] : memref<128x128xf32, #tpu.memory_space<vmem>>, vector<128x128xf32>
    %c0_5 = arith.constant 0 : index
    %c0_6 = arith.constant 0 : index
    %3 = vector.load %arg6[%c0_5, %c0_6] : memref<1x128xf32, #tpu.memory_space<vmem>>, vector<1x128xf32>
    %c0_7 = arith.constant 0 : index
    %c0_8 = arith.constant 0 : index
    %4 = vector.load %arg1[%c0_7, %c0_8] : memref<8x384xf32, #tpu.memory_space<vmem>>, vector<8x384xf32>
    %cst = arith.constant dense<0.000000e+00> : vector<8x128xf32>
    %5 = tpu.matmul %4, %0, %cst {dimension_numbers = #tpu.dot_dimension_numbers<[1], [0], [0], [1], [0, 0, 1, 1], [], []>} : vector<8x384xf32>, vector<384x128xf32>, vector<8x128xf32> -> vector<8x128xf32>
    %6 = vector.broadcast %1 : vector<1x128xf32> to vector<8x128xf32>
    %7 = arith.addf %5, %6 : vector<8x128xf32>
    %cst_9 = arith.constant 0.000000e+00 : f32
    %8 = vector.broadcast %cst_9 : f32 to vector<8x128xf32>
    %9 = arith.cmpf oge, %7, %8 : vector<8x128xf32>
    %cst_10 = arith.constant 0.00999999977 : f32
    %10 = vector.broadcast %cst_10 : f32 to vector<8x128xf32>
    %11 = arith.mulf %10, %7 : vector<8x128xf32>
    %12 = arith.select %9, %7, %11 : vector<8x128xi1>, vector<8x128xf32>
    %cst_11 = arith.constant dense<0.000000e+00> : vector<8x128xf32>
    %13 = tpu.matmul %12, %2, %cst_11 {dimension_numbers = #tpu.dot_dimension_numbers<[1], [0], [0], [1], [0, 0, 1, 1], [], []>} : vector<8x128xf32>, vector<128x128xf32>, vector<8x128xf32> -> vector<8x128xf32>
    %14 = vector.broadcast %3 : vector<1x128xf32> to vector<8x128xf32>
    %15 = arith.addf %13, %14 : vector<8x128xf32>
    %cst_12 = arith.constant 0.000000e+00 : f32
    %16 = vector.broadcast %cst_12 : f32 to vector<8x128xf32>
    %17 = arith.cmpf oge, %15, %16 : vector<8x128xf32>
    %cst_13 = arith.constant 0.00999999977 : f32
    %18 = vector.broadcast %cst_13 : f32 to vector<8x128xf32>
    %19 = arith.mulf %18, %15 : vector<8x128xf32>
    %20 = arith.select %17, %15, %19 : vector<8x128xi1>, vector<8x128xf32>
    %c0_14 = arith.constant 0 : index
    %c0_15 = arith.constant 0 : index
    %21 = vector.load %arg7[%c0_14, %c0_15] : memref<8x128xf32, #tpu.memory_space<vmem>>, vector<8x128xf32>
    tpu.vector_store %arg7[%c0_14, %c0_15], %20 {strides = array<i32>} : memref<8x128xf32, #tpu.memory_space<vmem>>, vector<8x128xf32>,
    %c0_16 = arith.constant 0 : index
    %c0_17 = arith.constant 0 : index
    %22 = vector.load %arg2[%c0_16, %c0_17] : memref<8x384xf32, #tpu.memory_space<vmem>>, vector<8x384xf32>
    %cst_18 = arith.constant dense<0.000000e+00> : vector<8x128xf32>
    %23 = tpu.matmul %22, %0, %cst_18 {dimension_numbers = #tpu.dot_dimension_numbers<[1], [0], [0], [1], [0, 0, 1, 1], [], []>} : vector<8x384xf32>, vector<384x128xf32>, vector<8x128xf32> -> vector<8x128xf32>
    %24 = vector.broadcast %1 : vector<1x128xf32> to vector<8x128xf32>
    %25 = arith.addf %23, %24 : vector<8x128xf32>
    %cst_19 = arith.constant 0.000000e+00 : f32
    %26 = vector.broadcast %cst_19 : f32 to vector<8x128xf32>
    %27 = arith.cmpf oge, %25, %26 : vector<8x128xf32>
    %cst_20 = arith.constant 0.00999999977 : f32
    %28 = vector.broadcast %cst_20 : f32 to vector<8x128xf32>
    %29 = arith.mulf %28, %25 : vector<8x128xf32>
    %30 = arith.select %27, %25, %29 : vector<8x128xi1>, vector<8x128xf32>
    %cst_21 = arith.constant dense<0.000000e+00> : vector<8x128xf32>
    %31 = tpu.matmul %30, %2, %cst_21 {dimension_numbers = #tpu.dot_dimension_numbers<[1], [0], [0], [1], [0, 0, 1, 1], [], []>} : vector<8x128xf32>, vector<128x128xf32>, vector<8x128xf32> -> vector<8x128xf32>
    %32 = vector.broadcast %3 : vector<1x128xf32> to vector<8x128xf32>
    %33 = arith.addf %31, %32 : vector<8x128xf32>
    %cst_22 = arith.constant 0.000000e+00 : f32
    %34 = vector.broadcast %cst_22 : f32 to vector<8x128xf32>
    %35 = arith.cmpf oge, %33, %34 : vector<8x128xf32>
    %cst_23 = arith.constant 0.00999999977 : f32
    %36 = vector.broadcast %cst_23 : f32 to vector<8x128xf32>
    %37 = arith.mulf %36, %33 : vector<8x128xf32>
    %38 = arith.select %35, %33, %37 : vector<8x128xi1>, vector<8x128xf32>
    %c0_24 = arith.constant 0 : index
    %c0_25 = arith.constant 0 : index
    %39 = vector.load %arg8[%c0_24, %c0_25] : memref<8x128xf32, #tpu.memory_space<vmem>>, vector<8x128xf32>
    tpu.vector_store %arg8[%c0_24, %c0_25], %38 {strides = array<i32>} : memref<8x128xf32, #tpu.memory_space<vmem>>, vector<8x128xf32>,
    return
  }
  func.func @transform_0(%arg0: i32) -> (i32, i32) {
    %c0_i32 = arith.constant 0 : i32
    %c0_i32_0 = arith.constant 0 : i32
    return %arg0, %c0_i32 : i32, i32
  }
  func.func @transform_1(%arg0: i32) -> (i32, i32) {
    %c0_i32 = arith.constant 0 : i32
    %c0_i32_0 = arith.constant 0 : i32
    return %arg0, %c0_i32 : i32, i32
  }
  func.func @transform_2(%arg0: i32) -> (i32, i32) {
    %c0_i32 = arith.constant 0 : i32
    %c0_i32_0 = arith.constant 0 : i32
    %c0_i32_1 = arith.constant 0 : i32
    return %c0_i32, %c0_i32_0 : i32, i32
  }
  func.func @transform_3(%arg0: i32) -> (i32, i32) {
    %c0_i32 = arith.constant 0 : i32
    %c0_i32_0 = arith.constant 0 : i32
    %c0_i32_1 = arith.constant 0 : i32
    return %c0_i32, %c0_i32_0 : i32, i32
  }
  func.func @transform_4(%arg0: i32) -> (i32, i32) {
    %c0_i32 = arith.constant 0 : i32
    %c0_i32_0 = arith.constant 0 : i32
    %c0_i32_1 = arith.constant 0 : i32
    return %c0_i32, %c0_i32_0 : i32, i32
  }
  func.func @transform_5(%arg0: i32) -> (i32, i32) {
    %c0_i32 = arith.constant 0 : i32
    %c0_i32_0 = arith.constant 0 : i32
    %c0_i32_1 = arith.constant 0 : i32
    return %c0_i32, %c0_i32_0 : i32, i32
  }
  func.func @transform_6(%arg0: i32) -> (i32, i32) {
    %c0_i32 = arith.constant 0 : i32
    %c0_i32_0 = arith.constant 0 : i32
    return %arg0, %c0_i32 : i32, i32
  }
  func.func @transform_7(%arg0: i32) -> (i32, i32) {
    %c0_i32 = arith.constant 0 : i32
    %c0_i32_0 = arith.constant 0 : i32
    return %arg0, %c0_i32 : i32, i32
  }
}

</mosaic_0001>

<llo_original>
// kernel: twin_forward_padded.1
$region0: #{twin_forward_padded.1}
  #allocation0 [shape = 'u32[]', space=smem, size = 0x4, offset = 0x4, fixed_abs, tag = 'smem constant byte address 0x4 - core index']
  #allocation1 [shape = 'u32[144,128]{1,0:T(1,128)}', space=vmem, size = 0x12000, scoped, tag = 'internal scratch']
  %s0 = inlined_call_operand.hbm [shape: f32[8,384], index: 0, kind: input, shape index: {}]
  %s1 = inlined_call_operand.hbm [shape: f32[8,384], index: 1, kind: input, shape index: {}]
  %s2 = inlined_call_operand.hbm [shape: f32[384,128], index: 2, kind: input, shape index: {}]
  %s3 = inlined_call_operand.vmem [shape: f32[1,128], index: 3, kind: input, shape index: {}]
  %s4 = inlined_call_operand.hbm [shape: f32[128,128], index: 4, kind: input, shape index: {}]
  %s5 = inlined_call_operand.vmem [shape: f32[1,128], index: 5, kind: input, shape index: {}]
  %s6 = inlined_call_operand.hbm [shape: f32[8,128], index: 6, kind: output, shape index: {0}]
  %s7 = inlined_call_operand.hbm [shape: f32[8,128], index: 7, kind: output, shape index: {1}]
  %8 = xla_tuple %s6, %s7
  %s9 = sld [smem:[#allocation0]]
  $region58: #{twin_forward_padded.1} parent=0
    _
  %s11 = ssub.s32 1, %s9
  %s12 = scalar_select 0, %s11, %s9
  $region1: #{twin_forward_padded.1} parent=0
    #allocation2 [shape = 'u8[12288]{0}', space=vmem, size = 0x3000, scoped, tag = 'input window, operand 0, single buffered']
    #allocation3 [shape = 's32[1]{0}', space=sflag, size = 0x4, scoped, tag = 'scoped memory for twin_forward_padded.1']
    #allocation4 [shape = 's32[1]{0}', space=sflag, size = 0x4, scoped, tag = 'scoped memory for twin_forward_padded.1']
    #allocation5 [shape = 'u8[12288]{0}', space=vmem, size = 0x3000, scoped, tag = 'input window, operand 1, single buffered']
    #allocation6 [shape = 's32[1]{0}', space=sflag, size = 0x4, scoped, tag = 'scoped memory for twin_forward_padded.1']
    #allocation7 [shape = 'u8[196608]{0}', space=vmem, size = 0x30000, scoped, tag = 'input window, operand 2, single buffered']
    #allocation8 [shape = 'u8[65536]{0}', space=vmem, size = 0x10000, scoped, tag = 'input window, operand 4, single buffered']
    #allocation9 [shape = 's32[1]{0}', space=sflag, size = 0x4, scoped, tag = 'scoped memory for twin_forward_padded.1']
    #allocation10 [shape = 'u8[4096]{0}', space=vmem, size = 0x1000, scoped, tag = 'output window, operand 0, single buffered']
    #allocation11 [shape = 'u8[4096]{0}', space=vmem, size = 0x1000, scoped, tag = 'output window, operand 1, single buffered']
    #allocation12 [shape = 's32[1]{0}', space=sflag, size = 0x4, scoped, tag = 'scoped memory for twin_forward_padded.1']
    %13 = vsyncpa [#allocation3], 0
    %14 = vsyncpa [#allocation6], 0
    %15 = vsyncpa [#allocation9], 0
    %16 = vsyncpa [#allocation4], 0
    %17 = vsyncpa [#allocation12], 0
    // Predicated region
    $region2: #{twin_forward_padded.1} parent=1 // pred_check
      _
    $region3: #{twin_forward_padded.1} parent=1 // pred_check_branch
      %19 = sbr.rel (0) target = $region5
    $region4: #{twin_forward_padded.1} parent=1 // pred_region
      %s21 = ssub.s32 384, 384
      %22 = vsyncadd [#allocation3], %s21
      %s24 = sshll.u32 [#allocation2], 4
      %s25 = int_to_ptr.vmem [resolvable:$true] %s24
      %27 = dma.hbm_to_vmem [thread:$0]  %s0, 384, %s25, [#allocation3]
    $region5: #{twin_forward_padded.1} parent=1 // pred_fallthru
      _
    // Predicated region
    $region6: #{twin_forward_padded.1} parent=1 // pred_check
      _
    $region7: #{twin_forward_padded.1} parent=1 // pred_check_branch
      %29 = sbr.rel (0) target = $region9
    $region8: #{twin_forward_padded.1} parent=1 // pred_region
      %s31 = ssub.s32 384, 384
      %32 = vsyncadd [#allocation6], %s31
      %s34 = sshll.u32 [#allocation5], 4
      %s35 = int_to_ptr.vmem [resolvable:$true] %s34
      %37 = dma.hbm_to_vmem [thread:$0]  %s1, 384, %s35, [#allocation6]
    $region9: #{twin_forward_padded.1} parent=1 // pred_fallthru
      _
    // Predicated region
    $region10: #{twin_forward_padded.1} parent=1 // pred_check
      _
    $region11: #{twin_forward_padded.1} parent=1 // pred_check_branch
      %39 = sbr.rel (0) target = $region13
    $region12: #{twin_forward_padded.1} parent=1 // pred_region
      %s41 = ssub.s32 6144, 6144
      %42 = vsyncadd [#allocation6], %s41
      %s43 = sshll.u32 [#allocation7], 4
      %s44 = int_to_ptr.vmem [resolvable:$true] %s43
      %49 = dma.hbm_to_vmem [thread:$0]  %s2, 6144, %s44, [#allocation6], 128, 128, 8
    $region13: #{twin_forward_padded.1} parent=1 // pred_fallthru
      _
    // Predicated region
    $region14: #{twin_forward_padded.1} parent=1 // pred_check
      _
    $region15: #{twin_forward_padded.1} parent=1 // pred_check_branch
      %51 = sbr.rel (0) target = $region17
    $region16: #{twin_forward_padded.1} parent=1 // pred_region
      _
    $region17: #{twin_forward_padded.1} parent=1 // pred_fallthru
      _
    // Predicated region
    $region18: #{twin_forward_padded.1} parent=1 // pred_check
      _
    $region19: #{twin_forward_padded.1} parent=1 // pred_check_branch
      %53 = sbr.rel (0) target = $region21
    $region20: #{twin_forward_padded.1} parent=1 // pred_region
      %s55 = ssub.s32 2048, 2048
      %56 = vsyncadd [#allocation9], %s55
      %s57 = sshll.u32 [#allocation8], 4
      %s58 = int_to_ptr.vmem [resolvable:$true] %s57
      %63 = dma.hbm_to_vmem [thread:$0]  %s4, 2048, %s58, [#allocation9], 128, 128, 8
    $region21: #{twin_forward_padded.1} parent=1 // pred_fallthru
      _
    // Predicated region
    $region22: #{twin_forward_padded.1} parent=1 // pred_check
      _
    $region23: #{twin_forward_padded.1} parent=1 // pred_check_branch
      %65 = sbr.rel (0) target = $region25
    $region24: #{twin_forward_padded.1} parent=1 // pred_region
      _
    $region25: #{twin_forward_padded.1} parent=1 // pred_fallthru
      _
    // Predicated region
    $region26: #{twin_forward_padded.1} parent=1 // pred_check
      _
    $region27: #{twin_forward_padded.1} parent=1 // pred_check_branch
      %67 = sbr.rel (0) target = $region29
    $region28: #{twin_forward_padded.1} parent=1 // pred_region
      %68 = dma.done [#allocation3], 384
    $region29: #{twin_forward_padded.1} parent=1 // pred_fallthru
      _
    // Predicated region
    $region30: #{twin_forward_padded.1} parent=1 // pred_check
      _
    $region31: #{twin_forward_padded.1} parent=1 // pred_check_branch
      %70 = sbr.rel (0) target = $region33
    $region32: #{twin_forward_padded.1} parent=1 // pred_region
      %71 = dma.done [#allocation6], 384
    $region33: #{twin_forward_padded.1} parent=1 // pred_fallthru
      _
    // Predicated region
    $region34: #{twin_forward_padded.1} parent=1 // pred_check
      _
    $region35: #{twin_forward_padded.1} parent=1 // pred_check_branch
      %73 = sbr.rel (0) target = $region37
    $region36: #{twin_forward_padded.1} parent=1 // pred_region
      %74 = dma.done [#allocation6], 6144
    $region37: #{twin_forward_padded.1} parent=1 // pred_fallthru
      _
    // Predicated region
    $region38: #{twin_forward_padded.1} parent=1 // pred_check
      _
    $region39: #{twin_forward_padded.1} parent=1 // pred_check_branch
      %76 = sbr.rel (0) target = $region41
    $region40: #{twin_forward_padded.1} parent=1 // pred_region
      %77 = dma.done [#allocation9], 2048
    $region41: #{twin_forward_padded.1} parent=1 // pred_fallthru
      _
    %v78 = vld [vmem:[#allocation7] sm:$0xff]
    %v79 = vld [vmem:[#allocation7 + $0x8] sm:$0xff]
    %v80 = vld [vmem:[#allocation7 + $0x10] sm:$0xff]
    %v81 = vld [vmem:[#allocation7 + $0x18] sm:$0xff]
    %v82 = vld [vmem:[#allocation7 + $0x20] sm:$0xff]
    %v83 = vld [vmem:[#allocation7 + $0x28] sm:$0xff]
    %v84 = vld [vmem:[#allocation7 + $0x30] sm:$0xff]
    %v85 = vld [vmem:[#allocation7 + $0x38] sm:$0xff]
    %v86 = vld [vmem:[#allocation7 + $0x40] sm:$0xff]
    %v87 = vld [vmem:[#allocation7 + $0x48] sm:$0xff]
    %v88 = vld [vmem:[#allocation7 + $0x50] sm:$0xff]
    %v89 = vld [vmem:[#allocation7 + $0x58] sm:$0xff]
    %v90 = vld [vmem:[#allocation7 + $0x60] sm:$0xff]
    %v91 = vld [vmem:[#allocation7 + $0x68] sm:$0xff]
    %v92 = vld [vmem:[#allocation7 + $0x70] sm:$0xff]
    %v93 = vld [vmem:[#allocation7 + $0x78] sm:$0xff]
    %v94 = vld [vmem:[#allocation7 + $0x80] sm:$0xff]
    %v95 = vld [vmem:[#allocation7 + $0x88] sm:$0xff]
    %v96 = vld [vmem:[#allocation7 + $0x90] sm:$0xff]
    %v97 = vld [vmem:[#allocation7 + $0x98] sm:$0xff]
    %v98 = vld [vmem:[#allocation7 + $0xa0] sm:$0xff]
    %v99 = vld [vmem:[#allocation7 + $0xa8] sm:$0xff]
    %v100 = vld [vmem:[#allocation7 + $0xb0] sm:$0xff]
    %v101 = vld [vmem:[#allocation7 + $0xb8] sm:$0xff]
    %v102 = vld [vmem:[#allocation7 + $0xc0] sm:$0xff]
    %v103 = vld [vmem:[#allocation7 + $0xc8] sm:$0xff]
    %v104 = vld [vmem:[#allocation7 + $0xd0] sm:$0xff]
    %v105 = vld [vmem:[#allocation7 + $0xd8] sm:$0xff]
    %v106 = vld [vmem:[#allocation7 + $0xe0] sm:$0xff]
    %v107 = vld [vmem:[#allocation7 + $0xe8] sm:$0xff]
    %v108 = vld [vmem:[#allocation7 + $0xf0] sm:$0xff]
    %v109 = vld [vmem:[#allocation7 + $0xf8] sm:$0xff]
    %v110 = vld [vmem:[#allocation7 + $0x100] sm:$0xff]
    %v111 = vld [vmem:[#allocation7 + $0x108] sm:$0xff]
    %v112 = vld [vmem:[#allocation7 + $0x110] sm:$0xff]
    %v113 = vld [vmem:[#allocation7 + $0x118] sm:$0xff]
    %v114 = vld [vmem:[#allocation7 + $0x120] sm:$0xff]
    %v115 = vld [vmem:[#allocation7 + $0x128] sm:$0xff]
    %v116 = vld [vmem:[#allocation7 + $0x130] sm:$0xff]
    %v117 = vld [vmem:[#allocation7 + $0x138] sm:$0xff]
    %v118 = vld [vmem:[#allocation7 + $0x140] sm:$0xff]
    %v119 = vld [vmem:[#allocation7 + $0x148] sm:$0xff]
    %v120 = vld [vmem:[#allocation7 + $0x150] sm:$0xff]
    %v121 = vld [vmem:[#allocation7 + $0x158] sm:$0xff]
    %v122 = vld [vmem:[#allocation7 + $0x160] sm:$0xff]
    %v123 = vld [vmem:[#allocation7 + $0x168] sm:$0xff]
    %v124 = vld [vmem:[#allocation7 + $0x170] sm:$0xff]
    %v125 = vld [vmem:[#allocation7 + $0x178] sm:$0xff]
    %v126 = vld [vmem:[%s3] sm:$0x1]
    %v127 = vld [vmem:[#allocation8] sm:$0xff]
    %v128 = vld [vmem:[#allocation8 + $0x8] sm:$0xff]
    %v129 = vld [vmem:[#allocation8 + $0x10] sm:$0xff]
    %v130 = vld [vmem:[#allocation8 + $0x18] sm:$0xff]
    %v131 = vld [vmem:[#allocation8 + $0x20] sm:$0xff]
    %v132 = vld [vmem:[#allocation8 + $0x28] sm:$0xff]
    %v133 = vld [vmem:[#allocation8 + $0x30] sm:$0xff]
    %v134 = vld [vmem:[#allocation8 + $0x38] sm:$0xff]
    %v135 = vld [vmem:[#allocation8 + $0x40] sm:$0xff]
    %v136 = vld [vmem:[#allocation8 + $0x48] sm:$0xff]
    %v137 = vld [vmem:[#allocation8 + $0x50] sm:$0xff]
    %v138 = vld [vmem:[#allocation8 + $0x58] sm:$0xff]
    %v139 = vld [vmem:[#allocation8 + $0x60] sm:$0xff]
    %v140 = vld [vmem:[#allocation8 + $0x68] sm:$0xff]
    %v141 = vld [vmem:[#allocation8 + $0x70] sm:$0xff]
    %v142 = vld [vmem:[#allocation8 + $0x78] sm:$0xff]
    %v143 = vld [vmem:[%s5] sm:$0x1]
    %v144 = vld [vmem:[#allocation2] sm:$0xff]
    %v145 = vld [vmem:[#allocation2 + $0x8] sm:$0xff]
    %v146 = vld [vmem:[#allocation2 + $0x10] sm:$0xff]
    %v148 = vlaneseq
    %v149 = vshrl.u32 %v148, 7
    %v150 = vsub.s32 0, %v149
    %v151 = vrot.slane %v126, %v150
    %153 = vmatprep.subr.mxu0 0.0
    %154 = vmatpush1.msra.mxu0 %v78
    %155 = vmatprep.subr.mxu0 0.0
    %156 = vmatpush1.msra.mxu0 %v79
    %157 = vmatprep.subr.mxu0 0.0
    %158 = vmatpush1.msra.mxu0 %v80
    %159 = vmatprep.subr.mxu0 0.0
    %160 = vmatpush1.msra.mxu0 %v81
    %161 = vmatprep.subr.mxu0 0.0
    %162 = vmatpush1.msra.mxu0 %v82
    %163 = vmatprep.subr.mxu0 0.0
    %164 = vmatpush1.msra.mxu0 %v83
    %165 = vmatprep.subr.mxu0 0.0
    %166 = vmatpush1.msra.mxu0 %v84
    %167 = vmatprep.subr.mxu0 0.0
    %168 = vmatpush1.msra.mxu0 %v85
    %169 = vmatprep.subr.mxu0 0.0
    %170 = vmatpush1.msra.mxu0 %v86
    %171 = vmatprep.subr.mxu0 0.0
    %172 = vmatpush1.msra.mxu0 %v87
    %173 = vmatprep.subr.mxu0 0.0
    %174 = vmatpush1.msra.mxu0 %v88
    %175 = vmatprep.subr.mxu0 0.0
    %176 = vmatpush1.msra.mxu0 %v89
    %177 = vmatprep.subr.mxu0 0.0
    %178 = vmatpush1.msra.mxu0 %v90
    %179 = vmatprep.subr.mxu0 0.0
    %180 = vmatpush1.msra.mxu0 %v91
    %181 = vmatprep.subr.mxu0 0.0
    %182 = vmatpush1.msra.mxu0 %v92
    %183 = vmatprep.subr.mxu0 0.0
    %184 = vmatpush1.msra.mxu0 %v93
    %185 = vmatprep.subr.mxu0 0.0
    %186 = vmatpush1.msra.mxu0 %v94
    %187 = vmatprep.subr.mxu0 0.0
    %188 = vmatpush1.msra.mxu0 %v95
    %189 = vmatprep.subr.mxu0 0.0
    %190 = vmatpush1.msra.mxu0 %v96
    %191 = vmatprep.subr.mxu0 0.0
    %192 = vmatpush1.msra.mxu0 %v97
    %193 = vmatprep.subr.mxu0 0.0
    %194 = vmatpush1.msra.mxu0 %v98
    %195 = vmatprep.subr.mxu0 0.0
    %196 = vmatpush1.msra.mxu0 %v99
    %197 = vmatprep.subr.mxu0 0.0
    %198 = vmatpush1.msra.mxu0 %v100
    %199 = vmatprep.subr.mxu0 0.0
    %200 = vmatpush1.msra.mxu0 %v101
    %201 = vmatprep.subr.mxu0 0.0
    %202 = vmatpush1.msra.mxu0 %v102
    %203 = vmatprep.subr.mxu0 0.0
    %204 = vmatpush1.msra.mxu0 %v103
    %205 = vmatprep.subr.mxu0 0.0
    %206 = vmatpush1.msra.mxu0 %v104
    %207 = vmatprep.subr.mxu0 0.0
    %208 = vmatpush1.msra.mxu0 %v105
    %209 = vmatprep.subr.mxu0 0.0
    %210 = vmatpush1.msra.mxu0 %v106
    %211 = vmatprep.subr.mxu0 0.0
    %212 = vmatpush1.msra.mxu0 %v107
    %213 = vmatprep.subr.mxu0 0.0
    %214 = vmatpush1.msra.mxu0 %v108
    %215 = vmatprep.subr.mxu0 0.0
    %216 = vmatpush1.msra.mxu0 %v109
    %217 = vmatprep.mubr.f32.mxu0 %v145
    %218 = vmatmul.mubr.f32.gmra.mrb[0].mxu0 %v144
    %v219 = vpop.f32.mrb[0].mxu0
    %v220 = vadd.f32 %v151, %v219
    %v221 = vpop.f32.mrb[0].mxu0
    %222 = vdwg.mxu0
    %223 = vmatprep.subr.mxu0 0.0
    %224 = vmatpush1.msra.mxu0 %v110
    %225 = vmatprep.subr.mxu0 0.0
    %226 = vmatpush1.msra.mxu0 %v111
    %227 = vmatprep.subr.mxu0 0.0
    %228 = vmatpush1.msra.mxu0 %v112
    %229 = vmatprep.subr.mxu0 0.0
    %230 = vmatpush1.msra.mxu0 %v113
    %231 = vmatprep.subr.mxu0 0.0
    %232 = vmatpush1.msra.mxu0 %v114
    %233 = vmatprep.subr.mxu0 0.0
    %234 = vmatpush1.msra.mxu0 %v115
    %235 = vmatprep.subr.mxu0 0.0
    %236 = vmatpush1.msra.mxu0 %v116
    %237 = vmatprep.subr.mxu0 0.0
    %238 = vmatpush1.msra.mxu0 %v117
    %239 = vmatprep.subr.mxu0 0.0
    %240 = vmatpush1.msra.mxu0 %v118
    %241 = vmatprep.subr.mxu0 0.0
    %242 = vmatpush1.msra.mxu0 %v119
    %243 = vmatprep.subr.mxu0 0.0
    %244 = vmatpush1.msra.mxu0 %v120
    %245 = vmatprep.subr.mxu0 0.0
    %246 = vmatpush1.msra.mxu0 %v121
    %247 = vmatprep.subr.mxu0 0.0
    %248 = vmatpush1.msra.mxu0 %v122
    %249 = vmatprep.subr.mxu0 0.0
    %250 = vmatpush1.msra.mxu0 %v123
    %251 = vmatprep.subr.mxu0 0.0
    %252 = vmatpush1.msra.mxu0 %v124
    %253 = vmatprep.subr.mxu0 0.0
    %254 = vmatpush1.msra.mxu0 %v125
    %255 = vmatprep.subr.mxu0 0.0
    %256 = vmatpush1.msra.mxu0 0.0
    %257 = vmatprep.subr.mxu0 0.0
    %258 = vmatpush1.msra.mxu0 0.0
    %259 = vmatprep.subr.mxu0 0.0
    %260 = vmatpush1.msra.mxu0 0.0
    %261 = vmatprep.subr.mxu0 0.0
    %262 = vmatpush1.msra.mxu0 0.0
    %263 = vmatprep.subr.mxu0 0.0
    %264 = vmatpush1.msra.mxu0 0.0
    %265 = vmatprep.subr.mxu0 0.0
    %266 = vmatpush1.msra.mxu0 0.0
    %267 = vmatprep.subr.mxu0 0.0
    %268 = vmatpush1.msra.mxu0 0.0
    %269 = vmatprep.subr.mxu0 0.0
    %270 = vmatpush1.msra.mxu0 0.0
    %271 = vmatprep.subr.mxu0 0.0
    %272 = vmatpush1.msra.mxu0 0.0
    %273 = vmatprep.subr.mxu0 0.0
    %274 = vmatpush1.msra.mxu0 0.0
    %275 = vmatprep.subr.mxu0 0.0
    %276 = vmatpush1.msra.mxu0 0.0
    %277 = vmatprep.subr.mxu0 0.0
    %278 = vmatpush1.msra.mxu0 0.0
    %279 = vmatprep.subr.mxu0 0.0
    %280 = vmatpush1.msra.mxu0 0.0
    %281 = vmatprep.subr.mxu0 0.0
    %282 = vmatpush1.msra.mxu0 0.0
    %283 = vmatprep.subr.mxu0 0.0
    %284 = vmatpush1.msra.mxu0 0.0
    %285 = vmatprep.subr.mxu0 0.0
    %286 = vmatpush1.msra.mxu0 0.0
    %287 = vmatprep.mubr.f32.mxu0 0.0
    %288 = vmatmul.mubr.f32.gmra.mrb[0].mxu0 %v146
    %v289 = vpop.f32.mrb[0].mxu0
    %v290 = vadd.f32 %v220, %v289
    %v291 = vpop.f32.mrb[0].mxu0
    %292 = vdwg.mxu0
    %vm293 = vcmp.ge.f32.partialorder %v290, 0.0
    %v294 = vmul.f32 %v290, 0.01
    %v295 = vsel %vm293, %v290, %v294
    %v297 = vlaneseq
    %v298 = vshrl.u32 %v297, 7
    %v299 = vsub.s32 0, %v298
    %v300 = vrot.slane %v143, %v299
    %302 = vmatprep.subr.mxu0 0.0
    %303 = vmatpush1.msra.mxu0 %v127
    %304 = vmatprep.subr.mxu0 0.0
    %305 = vmatpush1.msra.mxu0 %v128
    %306 = vmatprep.subr.mxu0 0.0
    %307 = vmatpush1.msra.mxu0 %v129
    %308 = vmatprep.subr.mxu0 0.0
    %309 = vmatpush1.msra.mxu0 %v130
    %310 = vmatprep.subr.mxu0 0.0
    %311 = vmatpush1.msra.mxu0 %v131
    %312 = vmatprep.subr.mxu0 0.0
    %313 = vmatpush1.msra.mxu0 %v132
    %314 = vmatprep.subr.mxu0 0.0
    %315 = vmatpush1.msra.mxu0 %v133
    %316 = vmatprep.subr.mxu0 0.0
    %317 = vmatpush1.msra.mxu0 %v134
    %318 = vmatprep.subr.mxu0 0.0
    %319 = vmatpush1.msra.mxu0 %v135
    %320 = vmatprep.subr.mxu0 0.0
    %321 = vmatpush1.msra.mxu0 %v136
    %322 = vmatprep.subr.mxu0 0.0
    %323 = vmatpush1.msra.mxu0 %v137
    %324 = vmatprep.subr.mxu0 0.0
    %325 = vmatpush1.msra.mxu0 %v138
    %326 = vmatprep.subr.mxu0 0.0
    %327 = vmatpush1.msra.mxu0 %v139
    %328 = vmatprep.subr.mxu0 0.0
    %329 = vmatpush1.msra.mxu0 %v140
    %330 = vmatprep.subr.mxu0 0.0
    %331 = vmatpush1.msra.mxu0 %v141
    %332 = vmatprep.subr.mxu0 0.0
    %333 = vmatpush1.msra.mxu0 %v142
    %334 = vmatprep.subr.mxu0 0.0
    %335 = vmatpush1.msra.mxu0 0.0
    %336 = vmatprep.subr.mxu0 0.0
    %337 = vmatpush1.msra.mxu0 0.0
    %338 = vmatprep.subr.mxu0 0.0
    %339 = vmatpush1.msra.mxu0 0.0
    %340 = vmatprep.subr.mxu0 0.0
    %341 = vmatpush1.msra.mxu0 0.0
    %342 = vmatprep.subr.mxu0 0.0
    %343 = vmatpush1.msra.mxu0 0.0
    %344 = vmatprep.subr.mxu0 0.0
    %345 = vmatpush1.msra.mxu0 0.0
    %346 = vmatprep.subr.mxu0 0.0
    %347 = vmatpush1.msra.mxu0 0.0
    %348 = vmatprep.subr.mxu0 0.0
    %349 = vmatpush1.msra.mxu0 0.0
    %350 = vmatprep.subr.mxu0 0.0
    %351 = vmatpush1.msra.mxu0 0.0
    %352 = vmatprep.subr.mxu0 0.0
    %353 = vmatpush1.msra.mxu0 0.0
    %354 = vmatprep.subr.mxu0 0.0
    %355 = vmatpush1.msra.mxu0 0.0
    %356 = vmatprep.subr.mxu0 0.0
    %357 = vmatpush1.msra.mxu0 0.0
    %358 = vmatprep.subr.mxu0 0.0
    %359 = vmatpush1.msra.mxu0 0.0
    %360 = vmatprep.subr.mxu0 0.0
    %361 = vmatpush1.msra.mxu0 0.0
    %362 = vmatprep.subr.mxu0 0.0
    %363 = vmatpush1.msra.mxu0 0.0
    %364 = vmatprep.subr.mxu0 0.0
    %365 = vmatpush1.msra.mxu0 0.0
    %366 = vmatprep.mubr.f32.mxu0 0.0
    %367 = vmatmul.mubr.f32.gmra.mrb[0].mxu0 %v295
    %v368 = vpop.f32.mrb[0].mxu0
    %v369 = vadd.f32 %v300, %v368
    %v370 = vpop.f32.mrb[0].mxu0
    %371 = vdwg.mxu0
    %vm372 = vcmp.ge.f32.partialorder %v369, 0.0
    %v373 = vmul.f32 %v369, 0.01
    %v374 = vsel %vm372, %v369, %v373
    %375 = vst [vmem:[#allocation10] sm:$0xff] %v374
    %v376 = vld [vmem:[#allocation5] sm:$0xff]
    %v377 = vld [vmem:[#allocation5 + $0x8] sm:$0xff]
    %v378 = vld [vmem:[#allocation5 + $0x10] sm:$0xff]
    %379 = vmatprep.subr.mxu0 0.0
    %380 = vmatpush1.msra.mxu0 %v78
    %381 = vmatprep.subr.mxu0 0.0
    %382 = vmatpush1.msra.mxu0 %v79
    %383 = vmatprep.subr.mxu0 0.0
    %384 = vmatpush1.msra.mxu0 %v80
    %385 = vmatprep.subr.mxu0 0.0
    %386 = vmatpush1.msra.mxu0 %v81
    %387 = vmatprep.subr.mxu0 0.0
    %388 = vmatpush1.msra.mxu0 %v82
    %389 = vmatprep.subr.mxu0 0.0
    %390 = vmatpush1.msra.mxu0 %v83
    %391 = vmatprep.subr.mxu0 0.0
    %392 = vmatpush1.msra.mxu0 %v84
    %393 = vmatprep.subr.mxu0 0.0
    %394 = vmatpush1.msra.mxu0 %v85
    %395 = vmatprep.subr.mxu0 0.0
    %396 = vmatpush1.msra.mxu0 %v86
    %397 = vmatprep.subr.mxu0 0.0
    %398 = vmatpush1.msra.mxu0 %v87
    %399 = vmatprep.subr.mxu0 0.0
    %400 = vmatpush1.msra.mxu0 %v88
    %401 = vmatprep.subr.mxu0 0.0
    %402 = vmatpush1.msra.mxu0 %v89
    %403 = vmatprep.subr.mxu0 0.0
    %404 = vmatpush1.msra.mxu0 %v90
    %405 = vmatprep.subr.mxu0 0.0
    %406 = vmatpush1.msra.mxu0 %v91
    %407 = vmatprep.subr.mxu0 0.0
    %408 = vmatpush1.msra.mxu0 %v92
    %409 = vmatprep.subr.mxu0 0.0
    %410 = vmatpush1.msra.mxu0 %v93
    %411 = vmatprep.subr.mxu0 0.0
    %412 = vmatpush1.msra.mxu0 %v94
    %413 = vmatprep.subr.mxu0 0.0
    %414 = vmatpush1.msra.mxu0 %v95
    %415 = vmatprep.subr.mxu0 0.0
    %416 = vmatpush1.msra.mxu0 %v96
    %417 = vmatprep.subr.mxu0 0.0
    %418 = vmatpush1.msra.mxu0 %v97
    %419 = vmatprep.subr.mxu0 0.0
    %420 = vmatpush1.msra.mxu0 %v98
    %421 = vmatprep.subr.mxu0 0.0
    %422 = vmatpush1.msra.mxu0 %v99
    %423 = vmatprep.subr.mxu0 0.0
    %424 = vmatpush1.msra.mxu0 %v100
    %425 = vmatprep.subr.mxu0 0.0
    %426 = vmatpush1.msra.mxu0 %v101
    %427 = vmatprep.subr.mxu0 0.0
    %428 = vmatpush1.msra.mxu0 %v102
    %429 = vmatprep.subr.mxu0 0.0
    %430 = vmatpush1.msra.mxu0 %v103
    %431 = vmatprep.subr.mxu0 0.0
    %432 = vmatpush1.msra.mxu0 %v104
    %433 = vmatprep.subr.mxu0 0.0
    %434 = vmatpush1.msra.mxu0 %v105
    %435 = vmatprep.subr.mxu0 0.0
    %436 = vmatpush1.msra.mxu0 %v106
    %437 = vmatprep.subr.mxu0 0.0
    %438 = vmatpush1.msra.mxu0 %v107
    %439 = vmatprep.subr.mxu0 0.0
    %440 = vmatpush1.msra.mxu0 %v108
    %441 = vmatprep.subr.mxu0 0.0
    %442 = vmatpush1.msra.mxu0 %v109
    %443 = vmatprep.mubr.f32.mxu0 %v377
    %444 = vmatmul.mubr.f32.gmra.mrb[0].mxu0 %v376
    %v445 = vpop.f32.mrb[0].mxu0
    %v446 = vadd.f32 %v151, %v445
    %v447 = vpop.f32.mrb[0].mxu0
    %448 = vdwg.mxu0
    %449 = vmatprep.subr.mxu0 0.0
    %450 = vmatpush1.msra.mxu0 %v110
    %451 = vmatprep.subr.mxu0 0.0
    %452 = vmatpush1.msra.mxu0 %v111
    %453 = vmatprep.subr.mxu0 0.0
    %454 = vmatpush1.msra.mxu0 %v112
    %455 = vmatprep.subr.mxu0 0.0
    %456 = vmatpush1.msra.mxu0 %v113
    %457 = vmatprep.subr.mxu0 0.0
    %458 = vmatpush1.msra.mxu0 %v114
    %459 = vmatprep.subr.mxu0 0.0
    %460 = vmatpush1.msra.mxu0 %v115
    %461 = vmatprep.subr.mxu0 0.0
    %462 = vmatpush1.msra.mxu0 %v116
    %463 = vmatprep.subr.mxu0 0.0
    %464 = vmatpush1.msra.mxu0 %v117
    %465 = vmatprep.subr.mxu0 0.0
    %466 = vmatpush1.msra.mxu0 %v118
    %467 = vmatprep.subr.mxu0 0.0
    %468 = vmatpush1.msra.mxu0 %v119
    %469 = vmatprep.subr.mxu0 0.0
    %470 = vmatpush1.msra.mxu0 %v120
    %471 = vmatprep.subr.mxu0 0.0
    %472 = vmatpush1.msra.mxu0 %v121
    %473 = vmatprep.subr.mxu0 0.0
    %474 = vmatpush1.msra.mxu0 %v122
    %475 = vmatprep.subr.mxu0 0.0
    %476 = vmatpush1.msra.mxu0 %v123
    %477 = vmatprep.subr.mxu0 0.0
    %478 = vmatpush1.msra.mxu0 %v124
    %479 = vmatprep.subr.mxu0 0.0
    %480 = vmatpush1.msra.mxu0 %v125
    %481 = vmatprep.subr.mxu0 0.0
    %482 = vmatpush1.msra.mxu0 0.0
    %483 = vmatprep.subr.mxu0 0.0
    %484 = vmatpush1.msra.mxu0 0.0
    %485 = vmatprep.subr.mxu0 0.0
    %486 = vmatpush1.msra.mxu0 0.0
    %487 = vmatprep.subr.mxu0 0.0
    %488 = vmatpush1.msra.mxu0 0.0
    %489 = vmatprep.subr.mxu0 0.0
    %490 = vmatpush1.msra.mxu0 0.0
    %491 = vmatprep.subr.mxu0 0.0
    %492 = vmatpush1.msra.mxu0 0.0
    %493 = vmatprep.subr.mxu0 0.0
    %494 = vmatpush1.msra.mxu0 0.0
    %495 = vmatprep.subr.mxu0 0.0
    %496 = vmatpush1.msra.mxu0 0.0
    %497 = vmatprep.subr.mxu0 0.0
    %498 = vmatpush1.msra.mxu0 0.0
    %499 = vmatprep.subr.mxu0 0.0
    %500 = vmatpush1.msra.mxu0 0.0
    %501 = vmatprep.subr.mxu0 0.0
    %502 = vmatpush1.msra.mxu0 0.0
    %503 = vmatprep.subr.mxu0 0.0
    %504 = vmatpush1.msra.mxu0 0.0
    %505 = vmatprep.subr.mxu0 0.0
    %506 = vmatpush1.msra.mxu0 0.0
    %507 = vmatprep.subr.mxu0 0.0
    %508 = vmatpush1.msra.mxu0 0.0
    %509 = vmatprep.subr.mxu0 0.0
    %510 = vmatpush1.msra.mxu0 0.0
    %511 = vmatprep.subr.mxu0 0.0
    %512 = vmatpush1.msra.mxu0 0.0
    %513 = vmatprep.mubr.f32.mxu0 0.0
    %514 = vmatmul.mubr.f32.gmra.mrb[0].mxu0 %v378
    %v515 = vpop.f32.mrb[0].mxu0
    %v516 = vadd.f32 %v446, %v515
    %v517 = vpop.f32.mrb[0].mxu0
    %518 = vdwg.mxu0
    %vm519 = vcmp.ge.f32.partialorder %v516, 0.0
    %v520 = vmul.f32 %v516, 0.01
    %v521 = vsel %vm519, %v516, %v520
    %522 = vmatprep.subr.mxu0 0.0
    %523 = vmatpush1.msra.mxu0 %v127
    %524 = vmatprep.subr.mxu0 0.0
    %525 = vmatpush1.msra.mxu0 %v128
    %526 = vmatprep.subr.mxu0 0.0
    %527 = vmatpush1.msra.mxu0 %v129
    %528 = vmatprep.subr.mxu0 0.0
    %529 = vmatpush1.msra.mxu0 %v130
    %530 = vmatprep.subr.mxu0 0.0
    %531 = vmatpush1.msra.mxu0 %v131
    %532 = vmatprep.subr.mxu0 0.0
    %533 = vmatpush1.msra.mxu0 %v132
    %534 = vmatprep.subr.mxu0 0.0
    %535 = vmatpush1.msra.mxu0 %v133
    %536 = vmatprep.subr.mxu0 0.0
    %537 = vmatpush1.msra.mxu0 %v134
    %538 = vmatprep.subr.mxu0 0.0
    %539 = vmatpush1.msra.mxu0 %v135
    %540 = vmatprep.subr.mxu0 0.0
    %541 = vmatpush1.msra.mxu0 %v136
    %542 = vmatprep.subr.mxu0 0.0
    %543 = vmatpush1.msra.mxu0 %v137
    %544 = vmatprep.subr.mxu0 0.0
    %545 = vmatpush1.msra.mxu0 %v138
    %546 = vmatprep.subr.mxu0 0.0
    %547 = vmatpush1.msra.mxu0 %v139
    %548 = vmatprep.subr.mxu0 0.0
    %549 = vmatpush1.msra.mxu0 %v140
    %550 = vmatprep.subr.mxu0 0.0
    %551 = vmatpush1.msra.mxu0 %v141
    %552 = vmatprep.subr.mxu0 0.0
    %553 = vmatpush1.msra.mxu0 %v142
    %554 = vmatprep.subr.mxu0 0.0
    %555 = vmatpush1.msra.mxu0 0.0
    %556 = vmatprep.subr.mxu0 0.0
    %557 = vmatpush1.msra.mxu0 0.0
    %558 = vmatprep.subr.mxu0 0.0
    %559 = vmatpush1.msra.mxu0 0.0
    %560 = vmatprep.subr.mxu0 0.0
    %561 = vmatpush1.msra.mxu0 0.0
    %562 = vmatprep.subr.mxu0 0.0
    %563 = vmatpush1.msra.mxu0 0.0
    %564 = vmatprep.subr.mxu0 0.0
    %565 = vmatpush1.msra.mxu0 0.0
    %566 = vmatprep.subr.mxu0 0.0
    %567 = vmatpush1.msra.mxu0 0.0
    %568 = vmatprep.subr.mxu0 0.0
    %569 = vmatpush1.msra.mxu0 0.0
    %570 = vmatprep.subr.mxu0 0.0
    %571 = vmatpush1.msra.mxu0 0.0
    %572 = vmatprep.subr.mxu0 0.0
    %573 = vmatpush1.msra.mxu0 0.0
    %574 = vmatprep.subr.mxu0 0.0
    %575 = vmatpush1.msra.mxu0 0.0
    %576 = vmatprep.subr.mxu0 0.0
    %577 = vmatpush1.msra.mxu0 0.0
    %578 = vmatprep.subr.mxu0 0.0
    %579 = vmatpush1.msra.mxu0 0.0
    %580 = vmatprep.subr.mxu0 0.0
    %581 = vmatpush1.msra.mxu0 0.0
    %582 = vmatprep.subr.mxu0 0.0
    %583 = vmatpush1.msra.mxu0 0.0
    %584 = vmatprep.subr.mxu0 0.0
    %585 = vmatpush1.msra.mxu0 0.0
    %586 = vmatprep.mubr.f32.mxu0 0.0
    %587 = vmatmul.mubr.f32.gmra.mrb[0].mxu0 %v521
    %v588 = vpop.f32.mrb[0].mxu0
    %v589 = vadd.f32 %v300, %v588
    %v590 = vpop.f32.mrb[0].mxu0
    %591 = vdwg.mxu0
    %vm592 = vcmp.ge.f32.partialorder %v589, 0.0
    %v593 = vmul.f32 %v589, 0.01
    %v594 = vsel %vm592, %v589, %v593
    %595 = vst [vmem:[#allocation11] sm:$0xff] %v594
    // Predicated region
    $region42: #{twin_forward_padded.1} parent=1 // pred_check
      _
    $region43: #{twin_forward_padded.1} parent=1 // pred_check_branch
      %597 = sbr.rel (0) target = $region45
    $region44: #{twin_forward_padded.1} parent=1 // pred_region
      %s599 = ssub.s32 128, 128
      %600 = vsyncadd [#allocation4], %s599
      %s602 = sshll.u32 [#allocation10], 4
      %s603 = int_to_ptr.vmem [resolvable:$true] %s602
      %605 = dma.vmem_to_hbm [thread:$0]  %s603, 128, %s6, [#allocation4]
    $region45: #{twin_forward_padded.1} parent=1 // pred_fallthru
      _
    // Predicated region
    $region46: #{twin_forward_padded.1} parent=1 // pred_check
      _
    $region47: #{twin_forward_padded.1} parent=1 // pred_check_branch
      %607 = sbr.rel (0) target = $region49
    $region48: #{twin_forward_padded.1} parent=1 // pred_region
      %s609 = ssub.s32 128, 128
      %610 = vsyncadd [#allocation12], %s609
      %s612 = sshll.u32 [#allocation11], 4
      %s613 = int_to_ptr.vmem [resolvable:$true] %s612
      %615 = dma.vmem_to_hbm [thread:$0]  %s613, 128, %s7, [#allocation12]
    $region49: #{twin_forward_padded.1} parent=1 // pred_fallthru
      _
    // Predicated region
    $region50: #{twin_forward_padded.1} parent=1 // pred_check
      _
    $region51: #{twin_forward_padded.1} parent=1 // pred_check_branch
      %617 = sbr.rel (0) target = $region53
    $region52: #{twin_forward_padded.1} parent=1 // pred_region
      %618 = dma.done [#allocation4], 128
    $region53: #{twin_forward_padded.1} parent=1 // pred_fallthru
      _
    // Predicated region
    $region54: #{twin_forward_padded.1} parent=1 // pred_check
      _
    $region55: #{twin_forward_padded.1} parent=1 // pred_check_branch
      %620 = sbr.rel (0) target = $region57
    $region56: #{twin_forward_padded.1} parent=1 // pred_region
      %621 = dma.done [#allocation12], 128
    $region57: #{twin_forward_padded.1} parent=1 // pred_fallthru
      _
    %622 = vsyncpa [#allocation3], 1
    %623 = vsyncpa [#allocation6], 1
    %624 = vsyncpa [#allocation9], 1
    %625 = vsyncpa [#allocation4], 1
    %626 = vsyncpa [#allocation12], 1

</llo_original>
